<compile_context>
chip_gen: v5e
topology: v5e:2x2
jax: 0.10.0
libtpu: 0.0.40
codegen_flags: <defaults>
</compile_context>

<pallas_src>
import jax
import jax.numpy as jnp
from jax.experimental import pallas as pl
from jax.experimental.pallas import tpu as pltpu


def _round_up(x, m):
    return (x + m - 1) // m * m


def path_embedding(paths, ent_table, rel_table, *, has_cls=True, chunk=256):
    """Pallas implementation of PathEmbedding.forward.

    paths:     [B, S] int   (S = path_length, +1 leading CLS if has_cls)
    ent_table: [NE, H]
    rel_table: [NR, H]
    returns:   [B, S, H] in the tables' dtype
    """
    b, s = paths.shape
    ne, h = ent_table.shape
    nr, h2 = rel_table.shape
    assert h == h2, "entity/relation hidden dims must match"
    assert ent_table.dtype == rel_table.dtype, "tables must share a dtype"
    dtype = ent_table.dtype

    n = b * s
    # Tokens per grid step: multiple of 8 (sublane rule) and at most `chunk`.
    t = min(chunk, _round_up(n, 8))
    n_pad = _round_up(n, t)
    n_chunks = n_pad // t

    # Per-position table selector, matching the torch parity rule.
    pos = jnp.arange(s, dtype=jnp.int32)
    if has_cls:
        is_ent = (pos == 0) | (pos % 2 == 1)   # CLS, e, r, e, r, ...
    else:
        is_ent = (pos % 2 == 0)                # e, r, e, r, ...

    ids = paths.astype(jnp.int32).reshape(n)
    flags = jnp.broadcast_to(is_ent.astype(jnp.int32)[None, :], (b, s)).reshape(n)
    if n_pad != n:
        pad = n_pad - n
        ids = jnp.pad(ids, (0, pad))
        flags = jnp.pad(flags, (0, pad), constant_values=1)

    def kernel(ids_ref, flags_ref, ent_hbm, rel_hbm, out_ref, gbuf, sem):
        # ids_ref/flags_ref: [n_pad] int32 in SMEM (scalar prefetch)
        # ent_hbm/rel_hbm:   full tables left in HBM (pl.ANY)
        # out_ref:           (t, h) VMEM output block for this chunk
        # gbuf:              (t, h) VMEM gather buffer
        # sem:               shared DMA semaphore
        base = pl.program_id(0) * t

        # Issue one row-DMA per valid token; all copies are in flight together.
        @pl.loop(0, t)
        def _start(i):
            tok = base + i

            @pl.when(tok < n)
            def _():
                row = ids_ref[tok]
                dst = gbuf.at[pl.ds(i, 1), :]

                @pl.when(flags_ref[tok] != 0)
                def _():
                    pltpu.make_async_copy(
                        ent_hbm.at[pl.ds(row, 1), :], dst, sem).start()

                @pl.when(flags_ref[tok] == 0)
                def _():
                    pltpu.make_async_copy(
                        rel_hbm.at[pl.ds(row, 1), :], dst, sem).start()

        # Drain: one wait per issued copy.  Every copy moves exactly H*itemsize
        # bytes and signals the same semaphore, so the waits balance exactly and
        # the last one only completes once every row has landed in gbuf.
        @pl.loop(0, t)
        def _drain(i):
            tok = base + i

            @pl.when(tok < n)
            def _():
                pltpu.make_async_copy(
                    ent_hbm.at[pl.ds(0, 1), :], gbuf.at[pl.ds(0, 1), :], sem
                ).wait()

        out_ref[...] = gbuf[...]

    grid_spec = pltpu.PrefetchScalarGridSpec(
        num_scalar_prefetch=2,
        grid=(n_chunks,),
        in_specs=[
            pl.BlockSpec(memory_space=pl.ANY),   # entity table stays in HBM
            pl.BlockSpec(memory_space=pl.ANY),   # relation table stays in HBM
        ],
        out_specs=pl.BlockSpec((t, h), lambda c, ids_ref, flags_ref: (c, 0)),
        scratch_shapes=[
            pltpu.VMEM((t, h), dtype),
            pltpu.SemaphoreType.DMA,
        ],
    )

    out = pl.pallas_call(
        kernel,
        out_shape=jax.ShapeDtypeStruct((n_pad, h), dtype),
        grid_spec=grid_spec,
        compiler_params=pltpu.CompilerParams(
            # Chunks are independent -> shard across v7x's 2 TensorCores.
            dimension_semantics=("parallel",),
        ),
    )(ids, flags, ent_table, rel_table)

    return out[:n].reshape(b, s, h)


def path_embedding_ref(paths, ent_table, rel_table, *, has_cls=True):
    """Pure-JAX reference mirroring the torch forward."""
    outs = []
    if has_cls:
        outs.append(ent_table[paths[:, 0]])
        body = paths[:, 1:]
    else:
        body = paths
    path_length = body.shape[1]
    for p in range(path_length):
        if p % 2 == 0:
            outs.append(ent_table[body[:, p]])
        else:
            outs.append(rel_table[body[:, p]])
    return jnp.stack(outs, axis=1)   # [B, S, H]


if __name__ == "__main__":
    B = 2
    path_length = 7          # e r e r e r e
    S = path_length + 1      # + CLS
    H = 32
    NE, NR = 32, 16

    k1, k2, k3, k4 = jax.random.split(jax.random.PRNGKey(0), 4)
    # nn.Embedding default init ~ N(0, 1)
    ent_table = jax.random.normal(k1, (NE, H), jnp.float32)
    rel_table = jax.random.normal(k2, (NR, H), jnp.float32)

    ent_ids = jax.random.randint(k3, (B, S), 0, NE)
    rel_ids = jax.random.randint(k4, (B, S), 0, NR)
    pos = jnp.arange(S)
    is_ent_pos = (pos == 0) | (pos % 2 == 1)
    paths = jnp.where(is_ent_pos[None, :], ent_ids, rel_ids).astype(jnp.int32)

    # has_cls=True path.
    out = jax.block_until_ready(
        path_embedding(paths, ent_table, rel_table, has_cls=True))
    ref = path_embedding_ref(paths, ent_table, rel_table, has_cls=True)
    assert out.shape == (B, S, H), out.shape
    assert jnp.allclose(out, ref, atol=1e-6), "mismatch vs reference (has_cls=True)"

    # has_cls=False path with a tiny chunk to exercise a multi-chunk grid and
    # tail padding (n = 14 tokens, chunk = 8 -> 2 chunks, 2 padded slots).
    S2 = 7                                   # e r e r e r e
    pos2 = jnp.arange(S2)
    is_ent2 = (pos2 % 2 == 0)
    paths2 = jnp.where(is_ent2[None, :], ent_ids[:, :S2], rel_ids[:, :S2]).astype(jnp.int32)
    out2 = jax.block_until_ready(
        path_embedding(paths2, ent_table, rel_table, has_cls=False, chunk=8))
    ref2 = path_embedding_ref(paths2, ent_table, rel_table, has_cls=False)
    assert out2.shape == (B, S2, H), out2.shape
    assert jnp.allclose(out2, ref2, atol=1e-6), "mismatch vs reference (has_cls=False)"

    print("KERNEL_OK")
</pallas_src>

<mosaic_0001>
module attributes {stable_mosaic.version = 11 : i64} {
  func.func @kernel(%arg0: i32, %arg1: memref<16xi32, #tpu.memory_space<smem>>, %arg2: memref<16xi32, #tpu.memory_space<smem>>, %arg3: memref<32x32xf32, #tpu.memory_space<any>>, %arg4: memref<16x32xf32, #tpu.memory_space<any>>, %arg5: memref<16x32xf32, #tpu.memory_space<vmem>>, %arg6: memref<16x32xf32, #tpu.memory_space<vmem>>, %arg7: memref<!tpu.dma_semaphore, #tpu.memory_space<semaphore_mem>>) attributes {dimension_semantics = [#tpu.dimension_semantics<parallel>], iteration_bounds = array<i64: 1>, scalar_prefetch = 2 : i64, scratch_operands = 2 : i64, tpu.core_type = #tpu.core_type<tc>, window_params = [{}, {}, {transform_indices = @transform_2, window_bounds = array<i64: 16, 32>}]} {
    %c16_i32 = arith.constant 16 : i32
    %0 = arith.muli %arg0, %c16_i32 : i32
    %c0_i32 = arith.constant 0 : i32
    %c16_i32_0 = arith.constant 16 : i32
    %1 = arith.addi %c0_i32, %c16_i32_0 : i32
    %c1_i32 = arith.constant 1 : i32
    scf.for %arg8 = %c0_i32 to %1 step %c1_i32  : i32 {
      %c1_i32_9 = arith.constant 1 : i32
      %5 = arith.muli %arg8, %c1_i32_9 : i32
      %c0_i32_10 = arith.constant 0 : i32
      %6 = arith.addi %c0_i32_10, %5 : i32
      %7 = arith.addi %0, %6 : i32
      %c16_i32_11 = arith.constant 16 : i32
      %8 = arith.cmpi slt, %7, %c16_i32_11 : i32
      %9 = arith.extui %8 : i1 to i32
      %c0_i32_12 = arith.constant 0 : i32
      %10 = arith.cmpi ne, %9, %c0_i32_12 : i32
      scf.if %10 {
        %11 = arith.index_cast %7 : i32 to index
        %12 = memref.load %arg1[%11] : memref<16xi32, #tpu.memory_space<smem>>
        %13 = arith.index_cast %7 : i32 to index
        %14 = memref.load %arg2[%13] : memref<16xi32, #tpu.memory_space<smem>>
        %c0_i32_13 = arith.constant 0 : i32
        %15 = arith.cmpi ne, %14, %c0_i32_13 : i32
        %16 = arith.extui %15 : i1 to i32
        %c0_i32_14 = arith.constant 0 : i32
        %17 = arith.cmpi ne, %16, %c0_i32_14 : i32
        scf.if %17 {
          %c0_i32_17 = arith.constant 0 : i32
          %23 = tpu.memref_slice %arg3[%12, %c0_i32_17] : memref<32x32xf32, #tpu.memory_space<any>> -> memref<1x32xf32, #tpu.memory_space<any>>
          %c0_i32_18 = arith.constant 0 : i32
          %24 = tpu.memref_slice %arg6[%6, %c0_i32_18] : memref<16x32xf32, #tpu.memory_space<vmem>> -> memref<1x32xf32, #tpu.memory_space<vmem>>
          tpu.enqueue_dma source(%23 : memref<1x32xf32, #tpu.memory_space<any>>) target(%24 : memref<1x32xf32, #tpu.memory_space<vmem>>) target_semaphore(%arg7 : memref<!tpu.dma_semaphore, #tpu.memory_space<semaphore_mem>>)
        } else {
        }
        %18 = arith.index_cast %7 : i32 to index
        %19 = memref.load %arg2[%18] : memref<16xi32, #tpu.memory_space<smem>>
        %c0_i32_15 = arith.constant 0 : i32
        %20 = arith.cmpi eq, %19, %c0_i32_15 : i32
        %21 = arith.extui %20 : i1 to i32
        %c0_i32_16 = arith.constant 0 : i32
        %22 = arith.cmpi ne, %21, %c0_i32_16 : i32
        scf.if %22 {
          %c0_i32_17 = arith.constant 0 : i32
          %23 = tpu.memref_slice %arg4[%12, %c0_i32_17] : memref<16x32xf32, #tpu.memory_space<any>> -> memref<1x32xf32, #tpu.memory_space<any>>
          %c0_i32_18 = arith.constant 0 : i32
          %24 = tpu.memref_slice %arg6[%6, %c0_i32_18] : memref<16x32xf32, #tpu.memory_space<vmem>> -> memref<1x32xf32, #tpu.memory_space<vmem>>
          tpu.enqueue_dma source(%23 : memref<1x32xf32, #tpu.memory_space<any>>) target(%24 : memref<1x32xf32, #tpu.memory_space<vmem>>) target_semaphore(%arg7 : memref<!tpu.dma_semaphore, #tpu.memory_space<semaphore_mem>>)
        } else {
        }
      } else {
      }
    }
    %c16_i32_1 = arith.constant 16 : i32
    %c0_i32_2 = arith.constant 0 : i32
    %c16_i32_3 = arith.constant 16 : i32
    %2 = arith.addi %c0_i32_2, %c16_i32_3 : i32
    %c1_i32_4 = arith.constant 1 : i32
    scf.for %arg8 = %c0_i32_2 to %2 step %c1_i32_4  : i32 {
      %c1_i32_9 = arith.constant 1 : i32
      %5 = arith.muli %arg8, %c1_i32_9 : i32
      %c0_i32_10 = arith.constant 0 : i32
      %6 = arith.addi %c0_i32_10, %5 : i32
      %7 = arith.addi %0, %6 : i32
      %c16_i32_11 = arith.constant 16 : i32
      %8 = arith.cmpi slt, %7, %c16_i32_11 : i32
      %9 = arith.extui %8 : i1 to i32
      %c0_i32_12 = arith.constant 0 : i32
      %10 = arith.cmpi ne, %9, %c0_i32_12 : i32
      scf.if %10 {
        %c0_i32_13 = arith.constant 0 : i32
        %c0_i32_14 = arith.constant 0 : i32
        %11 = tpu.memref_slice %arg3[%c0_i32_13, %c0_i32_14] : memref<32x32xf32, #tpu.memory_space<any>> -> memref<1x32xf32, #tpu.memory_space<any>>
        %c0_i32_15 = arith.constant 0 : i32
        %c0_i32_16 = arith.constant 0 : i32
        %12 = tpu.memref_slice %arg6[%c0_i32_15, %c0_i32_16] : memref<16x32xf32, #tpu.memory_space<vmem>> -> memref<1x32xf32, #tpu.memory_space<vmem>>
        tpu.wait_dma2 semaphore(%arg7 : memref<!tpu.dma_semaphore, #tpu.memory_space<semaphore_mem>>) src(%11 : memref<1x32xf32, #tpu.memory_space<any>>) dst(%12 : memref<1x32xf32, #tpu.memory_space<vmem>>)
      } else {
      }
    }
    %c16_i32_5 = arith.constant 16 : i32
    %c0 = arith.constant 0 : index
    %c0_6 = arith.constant 0 : index
    %3 = vector.load %arg6[%c0, %c0_6] : memref<16x32xf32, #tpu.memory_space<vmem>>, vector<16x32xf32>
    %c0_7 = arith.constant 0 : index
    %c0_8 = arith.constant 0 : index
    %4 = vector.load %arg5[%c0_7, %c0_8] : memref<16x32xf32, #tpu.memory_space<vmem>>, vector<16x32xf32>
    tpu.vector_store %arg5[%c0_7, %c0_8], %3 {strides = array<i32>} : memref<16x32xf32, #tpu.memory_space<vmem>>, vector<16x32xf32>,
    return
  }
  func.func @transform_2(%arg0: i32, %arg1: memref<16xi32, #tpu.memory_space<smem>>, %arg2: memref<16xi32, #tpu.memory_space<smem>>) -> (i32, i32) {
    %c0_i32 = arith.constant 0 : i32
    %c0_i32_0 = arith.constant 0 : i32
    return %arg0, %c0_i32 : i32, i32
  }
}

</mosaic_0001>

<llo_original>
// kernel: tpu_custom_call.1
$region0: #{tpu_custom_call.1}
  #allocation0 [shape = 'u32[]', space=smem, size = 0x4, offset = 0x4, fixed_abs, tag = 'smem constant byte address 0x4 - core index']
  #allocation1 [shape = 'u32[72,128]{1,0:T(1,128)}', space=vmem, size = 0x9000, scoped, tag = 'internal scratch']
  #allocation2 [shape = 'f32[16,32]{1,0:T(8,128)}', space=vmem, size = 0x2000, scoped, tag = 'scratch operand']
  #allocation3 [shape = 's32[1]{0}', space=sflag, size = 0x4, scoped, tag = 'scratch operand']
  #allocation4 [shape = 's32[1]{0}', space=sflag, size = 0x4, scoped, tag = 'scoped memory for tpu_custom_call.1']
  #allocation5 [shape = 'u8[512]{0}', space=smem, size = 0x200, scoped, tag = 'prefetched SMEM operand 0']
  #allocation6 [shape = 'u8[512]{0}', space=smem, size = 0x200, scoped, tag = 'prefetched SMEM operand 1']
  #allocation9 [shape = 's32[]', space=sflag, size = 0x4, offset = 0, fixed_abs, tag = 'sflag constant byte address 0x0 - dummy sync flag']
  #allocation10 [shape = 's32[]', space=sflag, size = 0x4, offset = 0, fixed_abs, tag = 'sflag constant byte address 0x0 - dummy sync flag']
  #allocation11 [shape = 'u32[]', space=smem, size = 0x4, offset = 0x44, fixed_abs, tag = 'smem constant byte address 0x44 - assertion arg 0']
  #allocation12 [shape = 'u32[]', space=smem, size = 0x4, offset = 0x48, fixed_abs, tag = 'smem constant byte address 0x48 - assertion arg 1']
  #allocation13 [shape = 's32[]', space=sflag, size = 0x4, offset = 0, fixed_abs, tag = 'sflag constant byte address 0x0 - dummy sync flag']
  #allocation14 [shape = 's32[]', space=sflag, size = 0x4, offset = 0, fixed_abs, tag = 'sflag constant byte address 0x0 - dummy sync flag']
  %s0 = inlined_call_operand.hbm [shape: s32[16], index: 0, kind: input, shape index: {}]
  %s1 = inlined_call_operand.hbm [shape: s32[16], index: 1, kind: input, shape index: {}]
  %s2 = inlined_call_operand.hbm [shape: f32[32,32], index: 2, kind: input, shape index: {}]
  %s3 = inlined_call_operand.hbm [shape: f32[16,32], index: 3, kind: input, shape index: {}]
  %s4 = inlined_call_operand.hbm [shape: f32[16,32], index: 4, kind: output, shape index: {}]
  %s5 = sld [smem:[#allocation0]]
  $region48: #{tpu_custom_call.1} parent=0
    _
  %s7 = ssub.s32 1, %s5
  %s8 = scalar_select 0, %s7, %s5
  %s10 = sshll.u32 %s0, 4
  %s11 = int_to_ptr.hbm [resolvable:$true] %s10
  %13 = dma.hbm_to_smem %s11, 16, [#allocation5], [#allocation4]
  %s15 = sshll.u32 %s1, 4
  %s16 = int_to_ptr.hbm [resolvable:$true] %s15
  %18 = dma.hbm_to_smem %s16, 16, [#allocation6], [#allocation4]
  %20 = dma.done [#allocation4], 32
  %21 = sfence
  $region1: #{tpu_custom_call.1} parent=0
    #allocation7 [shape = 'u8[8192]{0}', space=vmem, size = 0x2000, scoped, tag = 'output window, operand 0, single buffered']
    #allocation8 [shape = 's32[1]{0}', space=sflag, size = 0x4, scoped, tag = 'scoped memory for tpu_custom_call.1']
    %22 = vsyncpa [#allocation8], 0
    %s23 = smul.u32 0, 16
    loop: start=0, step=1, limit=16
    $region2: #{tpu_custom_call.1} parent=1 // loop_pre_header
      _
    $region3: #{tpu_custom_call.1} parent=1 // loop_header
      %s25 = sphi 0, %s29
      %p26 = scmp.ge.s32.totalorder %s25, 16
    $region4: #{tpu_custom_call.1} parent=1 // loop_header_branch
      %28 = sbr.rel (%p26) target = $region8
    $region5: #{tpu_custom_call.1} parent=1 // loop_body
      %s30 = sadd.s32 %s23, %s25
      %p31 = scmp.lt.s32.totalorder %s30, 16
      // Predicated region
      $region9: #{tpu_custom_call.1} parent=5 // pred_check
        %p32 = pneg %p31
      $region10: #{tpu_custom_call.1} parent=5 // pred_check_branch
        %34 = sbr.rel (%p32) target = $region12
      $region11: #{tpu_custom_call.1} parent=5 // pred_region
        %s35 = sld [smem:[#allocation5 + %s30]]
        %s36 = sld [smem:[#allocation6 + %s30]]
        %p37 = scmp.ne.s32.totalorder %s36, 0
        // Predicated region
        $region13: #{tpu_custom_call.1} parent=11 // pred_check
          %p38 = pneg %p37
        $region14: #{tpu_custom_call.1} parent=11 // pred_check_branch
          %40 = sbr.rel (%p38) target = $region16
        $region15: #{tpu_custom_call.1} parent=11 // pred_region
          %s41 = scalar_lea.hbm %s2, %s35
          %s42 = scalar_lea.vmem [#allocation2], %s25
          // Predicated region
          $region17: #{tpu_custom_call.1} parent=15 // pred_check
            _
          $region18: #{tpu_custom_call.1} parent=15 // pred_check_branch
            %44 = sbr.rel target = $region20
          $region19: #{tpu_custom_call.1} parent=15 // pred_region
            %45 = sst [smem:[#allocation11]] [#allocation10]
            %46 = sst [smem:[#allocation12]] [#allocation9]
          $region20: #{tpu_custom_call.1} parent=15 // pred_fallthru
            _
          %48 = shalt.err (0)
          %s50 = sshll.u32 %s41, 4
          %s51 = int_to_ptr.hbm [resolvable:$true] %s50
          %s52 = sshll.u32 %s42, 4
          %s53 = int_to_ptr.vmem [resolvable:$true] %s52
          %55 = dma.hbm_to_vmem [thread:$0]  %s51, 16, %s53, [#allocation3]
        $region16: #{tpu_custom_call.1} parent=11 // pred_fallthru
          _
        %s56 = sld [smem:[#allocation6 + %s30]]
        %p57 = scmp.eq.s32.totalorder %s56, 0
        // Predicated region
        $region21: #{tpu_custom_call.1} parent=11 // pred_check
          %p58 = pneg %p57
        $region22: #{tpu_custom_call.1} parent=11 // pred_check_branch
          %60 = sbr.rel (%p58) target = $region24
        $region23: #{tpu_custom_call.1} parent=11 // pred_region
          %s61 = scalar_lea.hbm %s3, %s35
          %s62 = scalar_lea.vmem [#allocation2], %s25
          // Predicated region
          $region25: #{tpu_custom_call.1} parent=23 // pred_check
            _
          $region26: #{tpu_custom_call.1} parent=23 // pred_check_branch
            %64 = sbr.rel target = $region28
          $region27: #{tpu_custom_call.1} parent=23 // pred_region
            %65 = sst [smem:[#allocation11]] [#allocation14]
            %66 = sst [smem:[#allocation12]] [#allocation13]
          $region28: #{tpu_custom_call.1} parent=23 // pred_fallthru
            _
          %68 = shalt.err (0)
          %s70 = sshll.u32 %s61, 4
          %s71 = int_to_ptr.hbm [resolvable:$true] %s70
          %s72 = sshll.u32 %s62, 4
          %s73 = int_to_ptr.vmem [resolvable:$true] %s72
          %75 = dma.hbm_to_vmem [thread:$0]  %s71, 16, %s73, [#allocation3]
        $region24: #{tpu_custom_call.1} parent=11 // pred_fallthru
          _
      $region12: #{tpu_custom_call.1} parent=5 // pred_fallthru
        _
    $region6: #{tpu_custom_call.1} parent=1 // loop_footer
      %s29 = sadd.s32 1, %s25
    $region7: #{tpu_custom_call.1} parent=1 // loop_footer_branch
      %24 = sbr.rel target = $region3
    $region8: #{tpu_custom_call.1} parent=1 // loop_exit
      _
    loop: start=0, step=1, limit=16
    $region29: #{tpu_custom_call.1} parent=1 // loop_pre_header
      _
    $region30: #{tpu_custom_call.1} parent=1 // loop_header
      %s77 = sphi 0, %s81
      %p78 = scmp.ge.s32.totalorder %s77, 16
    $region31: #{tpu_custom_call.1} parent=1 // loop_header_branch
      %80 = sbr.rel (%p78) target = $region35
    $region32: #{tpu_custom_call.1} parent=1 // loop_body
      %s82 = sadd.s32 %s23, %s77
      %p83 = scmp.lt.s32.totalorder %s82, 16
      // Predicated region
      $region36: #{tpu_custom_call.1} parent=32 // pred_check
        %p84 = pneg %p83
      $region37: #{tpu_custom_call.1} parent=32 // pred_check_branch
        %86 = sbr.rel (%p84) target = $region39
      $region38: #{tpu_custom_call.1} parent=32 // pred_region
        %s87 = smul.u32 1, 1
        %s88 = sshll.u32 %s87, 4
        %89 = dma.done [#allocation3], %s88
      $region39: #{tpu_custom_call.1} parent=32 // pred_fallthru
        _
    $region33: #{tpu_custom_call.1} parent=1 // loop_footer
      %s81 = sadd.s32 1, %s77
    $region34: #{tpu_custom_call.1} parent=1 // loop_footer_branch
      %76 = sbr.rel target = $region30
    $region35: #{tpu_custom_call.1} parent=1 // loop_exit
      _
    %v90 = vld [vmem:[#allocation2] sm:$0xff]
    %v91 = vld [vmem:[#allocation2 + $0x8] sm:$0xff]
    %vm92 = vcmask 261120
    %93 = vst.msk [vmem:[#allocation7] sm:$0xff] %vm92, %v90
    %94 = vst.msk [vmem:[#allocation7 + $0x8] sm:$0xff] %vm92, %v91
    // Predicated region
    $region40: #{tpu_custom_call.1} parent=1 // pred_check
      _
    $region41: #{tpu_custom_call.1} parent=1 // pred_check_branch
      %96 = sbr.rel (0) target = $region43
    $region42: #{tpu_custom_call.1} parent=1 // pred_region
      %98 = vsyncadd [#allocation8], 0
      %s99 = sshll.u32 [#allocation7], 4
      %s100 = int_to_ptr.vmem [resolvable:$true] %s99
      %s101 = sshll.u32 %s4, 4
      %s102 = int_to_ptr.hbm [resolvable:$true] %s101
      %107 = dma.vmem_to_hbm [thread:$0]  %s100, 256, %s102, [#allocation8], 128, 128, 8
    $region43: #{tpu_custom_call.1} parent=1 // pred_fallthru
      _
    // Predicated region
    $region44: #{tpu_custom_call.1} parent=1 // pred_check
      _
    $region45: #{tpu_custom_call.1} parent=1 // pred_check_branch
      %109 = sbr.rel (0) target = $region47
    $region46: #{tpu_custom_call.1} parent=1 // pred_region
      %111 = dma.done [#allocation8], 256
    $region47: #{tpu_custom_call.1} parent=1 // pred_fallthru
      _
    %112 = vsyncpa [#allocation8], 1
  %113 = vsyncmov [#allocation3]
  %s114 = vpop.sfrf %113
  %p115 = scmp.eq.s32.totalorder %s114, 0
  %p116 = pneg %p115
  %118 = shalt.err (%p116)

</llo_original>
